<compile_context>
chip_gen: v7x
topology: tpu7x:2x2x1
jax: 0.10.0
libtpu: 0.0.40
codegen_flags: <defaults>
</compile_context>

<pallas_src>
import functools

import jax
import jax.numpy as jnp
from jax import lax
from jax.experimental import pallas as pl
from jax.experimental.pallas import tpu as pltpu


def _maxpool_s1_kernel(x_ref, o_ref, *, H, W):
    """One block of (BR, H*W): BR independent, flattened spatial planes."""
    x = x_ref[...]                                      # (BR, H*W)

    # ---- max with right neighbour (replicate last column) ------------------
    if W > 1:
        # Shift-left by 1 on the flattened axis == (h, w) -> (h, w+1).
        x_w = jnp.concatenate([x[:, 1:], x[:, -1:]], axis=1)
        # At w == W-1 the shifted value belongs to the next row; replicate x.
        col = lax.broadcasted_iota(jnp.int32, x.shape, 1)
        x_w = jnp.where(col % W == W - 1, x, x_w)
        m = jnp.maximum(x, x_w)
    else:
        m = x

    # ---- max with bottom neighbour (replicate last row) --------------------
    if H > 1:
        # Shift-left by W == (h, w) -> (h+1, w); the trailing W lanes reuse
        # m's own last row, which is exactly replicate padding (no mask).
        m_h = jnp.concatenate([m[:, W:], m[:, -W:]], axis=1)
        out = jnp.maximum(m, m_h)
    else:
        out = m

    o_ref[...] = out


def max_pool_stride1(x, *, target_block_bytes=2 << 20):
    """x: (N, C, H, W) -> (N, C, H, W); equivalent to MaxPoolStride1.forward."""
    N, C, H, W = x.shape
    P = N * C
    HW = H * W
    # Free reshape (NCHW is contiguous): whole spatial plane on the lane axis.
    x2 = x.reshape(P, HW)

    itemsize = jnp.dtype(x.dtype).itemsize
    row_bytes = HW * itemsize
    # Sublane tile: 8 for 32-bit, 16 for 16-bit, 32 for 8-bit dtypes.
    sub = max(8, 8 * (4 // itemsize))
    if P <= sub:
        br = P                       # full extent -> always a legal block
    else:
        br = max(sub, (target_block_bytes // max(row_bytes, 1)) // sub * sub)
        br = min(br, (P // sub) * sub)
    block_bytes = br * row_bytes
    # TODO(synk): for very large planes (row_bytes >> 1 MiB) tile H with a
    # 1-row halo instead of taking whole planes, to stay inside v7x VMEM.

    grid = (pl.cdiv(P, br),)

    params = {"dimension_semantics": ("parallel",)}
    # in + out, double buffered -> ~4x block; only raise the scoped VMEM limit
    # if the most conservative default (16 MiB on v5e) would not cover it.
    needed = 4 * block_bytes + (2 << 20)
    if needed > (16 << 20):
        params["vmem_limit_bytes"] = int(min(needed, 48 << 20))

    out2 = pl.pallas_call(
        functools.partial(_maxpool_s1_kernel, H=H, W=W),
        out_shape=jax.ShapeDtypeStruct((P, HW), x.dtype),
        grid=grid,
        in_specs=[pl.BlockSpec((br, HW), lambda i: (i, 0))],
        out_specs=pl.BlockSpec((br, HW), lambda i: (i, 0)),
        compiler_params=pltpu.CompilerParams(**params),
    )(x2)

    return out2.reshape(N, C, H, W)


def _reference(x):
    # Pure-JAX reference of the PyTorch forward for a sanity check.
    xp = jnp.pad(x, ((0, 0), (0, 0), (0, 1), (0, 1)), mode="edge")
    return jnp.maximum(
        jnp.maximum(xp[:, :, :-1, :-1], xp[:, :, :-1, 1:]),
        jnp.maximum(xp[:, :, 1:, :-1], xp[:, :, 1:, 1:]),
    )


if __name__ == "__main__":
    key = jax.random.PRNGKey(0)
    x = jax.random.normal(key, (2, 4, 16, 16), dtype=jnp.float32)

    out = max_pool_stride1(x)
    jax.block_until_ready(out)

    ref = _reference(x)
    assert out.shape == x.shape
    assert jnp.allclose(out, ref), "mismatch vs reference"

    print("KERNEL_OK")
</pallas_src>

<mosaic_0001>
module attributes {stable_mosaic.version = 11 : i64} {
  func.func @_maxpool_s1_kernel(%arg0: i32, %arg1: memref<8x256xf32, #tpu.memory_space<vmem>>, %arg2: memref<8x256xf32, #tpu.memory_space<vmem>>) attributes {dimension_semantics = [#tpu.dimension_semantics<parallel>], iteration_bounds = array<i64: 1>, scalar_prefetch = 0 : i64, scratch_operands = 0 : i64, tpu.core_type = #tpu.core_type<tc>, window_params = [{transform_indices = @transform_0, window_bounds = array<i64: 8, 256>}, {transform_indices = @transform_1, window_bounds = array<i64: 8, 256>}]} {
    %c0 = arith.constant 0 : index
    %c0_0 = arith.constant 0 : index
    %0 = vector.load %arg1[%c0, %c0_0] : memref<8x256xf32, #tpu.memory_space<vmem>>, vector<8x256xf32>
    %1 = vector.extract_strided_slice %0 {offsets = [0, 1], sizes = [8, 255], strides = [1, 1]} : vector<8x256xf32> to vector<8x255xf32>
    %2 = vector.extract_strided_slice %0 {offsets = [0, 255], sizes = [8, 1], strides = [1, 1]} : vector<8x256xf32> to vector<8x1xf32>
    %3 = tpu.concatenate %1, %2 in 1 : vector<8x255xf32>, vector<8x1xf32> -> vector<8x256xf32>
    %4 = tpu.iota {dimensions = array<i32: 1>} : vector<8x256xi32>
    %c16_i32 = arith.constant 16 : i32
    %c0_i32 = arith.constant 0 : i32
    %5 = arith.cmpi eq, %c16_i32, %c0_i32 : i32
    %c1_i32 = arith.constant 1 : i32
    %6 = arith.select %5, %c1_i32, %c16_i32 : i32
    %7 = vector.broadcast %6 : i32 to vector<8x256xi32>
    %8 = arith.remsi %4, %7 : vector<8x256xi32>
    %c0_i32_1 = arith.constant 0 : i32
    %9 = vector.broadcast %c0_i32_1 : i32 to vector<8x256xi32>
    %10 = arith.cmpi ne, %8, %9 : vector<8x256xi32>
    %c0_i32_2 = arith.constant 0 : i32
    %11 = vector.broadcast %c0_i32_2 : i32 to vector<8x256xi32>
    %12 = arith.cmpi slt, %8, %11 : vector<8x256xi32>
    %c0_i32_3 = arith.constant 0 : i32
    %13 = arith.cmpi slt, %6, %c0_i32_3 : i32
    %14 = vector.broadcast %13 : i1 to vector<8x256xi1>
    %15 = vector.broadcast %14 : vector<8x256xi1> to vector<8x256xi1>
    %16 = arith.xori %12, %15 : vector<8x256xi1>
    %17 = arith.andi %16, %10 : vector<8x256xi1>
    %18 = vector.broadcast %6 : i32 to vector<8x256xi32>
    %19 = arith.addi %8, %18 : vector<8x256xi32>
    %20 = arith.select %17, %19, %8 : vector<8x256xi1>, vector<8x256xi32>
    %c15_i32 = arith.constant 15 : i32
    %21 = vector.broadcast %c15_i32 : i32 to vector<8x256xi32>
    %22 = arith.cmpi eq, %20, %21 : vector<8x256xi32>
    %23 = arith.select %22, %0, %3 : vector<8x256xi1>, vector<8x256xf32>
    %24 = arith.maximumf %0, %23 : vector<8x256xf32>
    %25 = vector.extract_strided_slice %24 {offsets = [0, 16], sizes = [8, 240], strides = [1, 1]} : vector<8x256xf32> to vector<8x240xf32>
    %26 = vector.extract_strided_slice %24 {offsets = [0, 240], sizes = [8, 16], strides = [1, 1]} : vector<8x256xf32> to vector<8x16xf32>
    %27 = tpu.concatenate %25, %26 in 1 : vector<8x240xf32>, vector<8x16xf32> -> vector<8x256xf32>
    %28 = arith.maximumf %24, %27 : vector<8x256xf32>
    %c0_4 = arith.constant 0 : index
    %c0_5 = arith.constant 0 : index
    %29 = vector.load %arg2[%c0_4, %c0_5] : memref<8x256xf32, #tpu.memory_space<vmem>>, vector<8x256xf32>
    tpu.vector_store %arg2[%c0_4, %c0_5], %28 {strides = array<i32>} : memref<8x256xf32, #tpu.memory_space<vmem>>, vector<8x256xf32>,
    return
  }
  func.func @transform_0(%arg0: i32) -> (i32, i32) {
    %c0_i32 = arith.constant 0 : i32
    %c0_i32_0 = arith.constant 0 : i32
    return %arg0, %c0_i32 : i32, i32
  }
  func.func @transform_1(%arg0: i32) -> (i32, i32) {
    %c0_i32 = arith.constant 0 : i32
    %c0_i32_0 = arith.constant 0 : i32
    return %arg0, %c0_i32 : i32, i32
  }
}

</mosaic_0001>

<llo_original>
// kernel: tpu_custom_call.1
$region0: #{tpu_custom_call.1}
  #allocation0 [shape = 'u32[]', space=smem, size = 0x4, offset = 0x4, fixed_abs, tag = 'smem constant byte address 0x4 - core index']
  #allocation1 [shape = 'u32[144,128]{1,0:T(1,128)}', space=vmem, size = 0x12000, scoped, tag = 'internal scratch']
  %s0 = inlined_call_operand.hbm [shape: f32[8,256], index: 0, kind: input, shape index: {}]
  %s1 = inlined_call_operand.hbm [shape: f32[8,256], index: 1, kind: output, shape index: {}]
  %s2 = sld [smem:[#allocation0]]
  $region18: #{tpu_custom_call.1} parent=0
    _
  %s4 = ssub.s32 1, %s2
  %s5 = scalar_select 0, %s4, %s2
  $region1: #{tpu_custom_call.1} parent=0
    #allocation2 [shape = 'u8[8192]{0}', space=vmem, size = 0x2000, scoped, tag = 'input window, operand 0, single buffered']
    #allocation3 [shape = 's32[1]{0}', space=sflag, size = 0x4, scoped, tag = 'scoped memory for tpu_custom_call.1']
    #allocation4 [shape = 's32[1]{0}', space=sflag, size = 0x4, scoped, tag = 'scoped memory for tpu_custom_call.1']
    #allocation5 [shape = 'u8[8192]{0}', space=vmem, size = 0x2000, scoped, tag = 'output window, operand 0, single buffered']
    %6 = vsyncpa [#allocation3], 0
    %7 = vsyncpa [#allocation4], 0
    // Predicated region
    $region2: #{tpu_custom_call.1} parent=1 // pred_check
      _
    $region3: #{tpu_custom_call.1} parent=1 // pred_check_branch
      %9 = sbr.rel (0) target = $region5
    $region4: #{tpu_custom_call.1} parent=1 // pred_region
      %s11 = ssub.s32 256, 256
      %12 = vsyncadd [#allocation3], %s11
      %s14 = sshll.u32 [#allocation2], 4
      %s15 = int_to_ptr.vmem [resolvable:$true] %s14
      %17 = dma.hbm_to_vmem [thread:$0]  %s0, 256, %s15, [#allocation3]
    $region5: #{tpu_custom_call.1} parent=1 // pred_fallthru
      _
    // Predicated region
    $region6: #{tpu_custom_call.1} parent=1 // pred_check
      _
    $region7: #{tpu_custom_call.1} parent=1 // pred_check_branch
      %19 = sbr.rel (0) target = $region9
    $region8: #{tpu_custom_call.1} parent=1 // pred_region
      %20 = dma.done [#allocation3], 256
    $region9: #{tpu_custom_call.1} parent=1 // pred_fallthru
      _
    %v21 = vld [vmem:[#allocation2] sm:$0xff]
    %v22 = vld [vmem:[#allocation2 + $0x8] sm:$0xff]
    %25 = vrot.lane.b32.xlu0 %v21, 127
    %v26 = vpop.permute.xlu0 %25
    %27 = vrot.lane.b32.xlu0 %v22, 127
    %v28 = vpop.permute.xlu0 %27
    %vm29 = vcmask 1039360
    %v30 = vsel %vm29, %v26, %v28
    %v33 = vsel %vm29, %v28, %v22
    %v34 = vlaneseq
    %v35 = vand.u32 %v34, 127
    %v36 = vadd.s32 %v35, 128
    %vm37 = vcmp.lt.s32.totalorder %v35, 0
    %v38 = vsub.s32 0, %v35
    %v39 = vsel %vm37, %v38, %v35
    %v40 = vshrl.u32 %v39, 4
    %v41 = vand.u32 %v39, 15
    %v42 = vsub.s32 0, %v41
    %v43 = vsel %vm37, %v42, %v41
    %vm44 = vcmp.lt.s32.totalorder %v36, 0
    %v45 = vsub.s32 0, %v36
    %v46 = vsel %vm44, %v45, %v36
    %v47 = vshrl.u32 %v46, 4
    %v48 = vand.u32 %v46, 15
    %v49 = vsub.s32 0, %v48
    %v50 = vsel %vm44, %v49, %v48
    %vm51 = vcmp.ne.s32.totalorder %v43, 0
    %vm52 = vcmp.ne.s32.totalorder %v50, 0
    %vm53 = vcmp.lt.s32.totalorder %v43, 0
    %vm54 = vcmp.lt.s32.totalorder %v50, 0
    %vm55 = vmand %vm53, %vm51
    %vm56 = vmand %vm54, %vm52
    %v57 = vadd.s32 %v43, 16
    %v58 = vadd.s32 %v50, 16
    %v59 = vsel %vm55, %v57, %v43
    %v60 = vsel %vm56, %v58, %v50
    %vm61 = vcmp.eq.s32.totalorder %v59, 15
    %vm62 = vcmp.eq.s32.totalorder %v60, 15
    %v63 = vsel %vm61, %v21, %v30
    %v64 = vsel %vm62, %v22, %v33
    %v65 = vmax.f32 %v21, %v63
    %v66 = vmax.f32 %v22, %v64
    %69 = vrot.lane.b32.xlu0 %v65, 112
    %v70 = vpop.permute.xlu0 %69
    %71 = vrot.lane.b32.xlu0 %v66, 112
    %v72 = vpop.permute.xlu0 %71
    %vm73 = vcmask 916480
    %v74 = vsel %vm73, %v70, %v72
    %v77 = vsel %vm73, %v72, %v66
    %v78 = vmax.f32 %v65, %v74
    %v79 = vmax.f32 %v66, %v77
    %80 = vst [vmem:[#allocation5] sm:$0xff] %v78
    %81 = vst [vmem:[#allocation5 + $0x8] sm:$0xff] %v79
    // Predicated region
    $region10: #{tpu_custom_call.1} parent=1 // pred_check
      _
    $region11: #{tpu_custom_call.1} parent=1 // pred_check_branch
      %83 = sbr.rel (0) target = $region13
    $region12: #{tpu_custom_call.1} parent=1 // pred_region
      %s85 = ssub.s32 256, 256
      %86 = vsyncadd [#allocation4], %s85
      %s88 = sshll.u32 [#allocation5], 4
      %s89 = int_to_ptr.vmem [resolvable:$true] %s88
      %91 = dma.vmem_to_hbm [thread:$0]  %s89, 256, %s1, [#allocation4]
    $region13: #{tpu_custom_call.1} parent=1 // pred_fallthru
      _
    // Predicated region
    $region14: #{tpu_custom_call.1} parent=1 // pred_check
      _
    $region15: #{tpu_custom_call.1} parent=1 // pred_check_branch
      %93 = sbr.rel (0) target = $region17
    $region16: #{tpu_custom_call.1} parent=1 // pred_region
      %94 = dma.done [#allocation4], 256
    $region17: #{tpu_custom_call.1} parent=1 // pred_fallthru
      _
    %95 = vsyncpa [#allocation3], 1
    %96 = vsyncpa [#allocation4], 1

</llo_original>
